<compile_context>
chip_gen: v5e
topology: v5e:2x2
jax: 0.10.0
libtpu: 0.0.40
codegen_flags: <defaults>
</compile_context>

<pallas_src>
import jax
import jax.numpy as jnp
from jax.experimental import pallas as pl
from jax.experimental.pallas import tpu as pltpu


def _ipd_cos_kernel(p_ref, o_ref):
    """p_ref: (1, C, F, tT) phase tile; o_ref: (1, C-1, F, tT) cos-IPD tile."""
    # Reference channel loaded once per tile, reused for every pair.
    p0 = p_ref[0, 0].astype(jnp.float32)            # (F, tT)
    n_pairs = o_ref.shape[1]                        # static, small (C-1)
    for m in range(n_pairs):                        # static unroll
        pm = p_ref[0, m + 1].astype(jnp.float32)
        o_ref[0, m] = jnp.cos(pm - p0).astype(o_ref.dtype)


def _choose_time_tile(T, bytes_per_col, budget_bytes=8 << 20):
    """Pick the largest lane-dense T-chunk (multiple of 128) within the VMEM
    budget, or the full T axis if everything already fits (always legal)."""
    max_cols = max(128, budget_bytes // max(1, bytes_per_col))
    if T <= max_cols:
        return T
    return max(128, (max_cols // 128) * 128)


def ipd_feature(p, cos=True, sin=False):
    """Pallas TPU implementation of IPDFeature.forward (cos-only default config
    used by RSAN).

    Args:
        p: phase tensor, (N, C, F, T) or (C, F, T).
    Returns:
        ipd: (N, (C-1)*F, T), same dtype as p.
    """
    if p.ndim not in (3, 4):
        raise RuntimeError(f"IPDFeature expects 3/4D tensor, got {p.ndim}D")
    if p.ndim == 3:
        p = p[None]
    if not (cos and not sin):
        # TODO(synk): sin / fmod branches of IPDFeature are not implemented.
        raise NotImplementedError("only cos=True, sin=False is implemented")

    N, C, F, T = p.shape
    if C < 2:
        raise ValueError("IPDFeature needs at least 2 channels")
    M = C - 1
    itemsize = jnp.dtype(p.dtype).itemsize

    # One tile = C input slabs + M output slabs of (F, tT).
    bytes_per_col = (C + M) * F * itemsize
    tT = _choose_time_tile(T, bytes_per_col)
    grid = (N, pl.cdiv(T, tT))

    tile_bytes = bytes_per_col * tT
    # Inputs and outputs are double-buffered by the pipeline; leave headroom
    # but stay under the v7x 64 MiB physical VMEM ceiling.
    vmem_limit = int(min(64 << 20, max(32 << 20, 3 * tile_bytes)))

    out = pl.pallas_call(
        _ipd_cos_kernel,
        out_shape=jax.ShapeDtypeStruct((N, M, F, T), p.dtype),
        grid=grid,
        in_specs=[
            # All channels for this (batch, T-chunk): channel 0 fetched once.
            pl.BlockSpec((1, C, F, tT), lambda n, t: (n, 0, 0, t)),
        ],
        out_specs=pl.BlockSpec((1, M, F, tT), lambda n, t: (n, 0, 0, t)),
        compiler_params=pltpu.CompilerParams(
            dimension_semantics=("parallel", "parallel"),
            vmem_limit_bytes=vmem_limit,
        ),
    )(p)

    # Contiguous merge of (M, F) axes only -> no data movement; identical to
    # PyTorch's ipd.view(N, -1, T).
    return out.reshape(N, M * F, T)


if __name__ == "__main__":
    # Small shapes consistent with the module: N=2 batches, C=4 mics,
    # F=16 freq bins, T=16 frames. Phases in [-pi, pi] like an STFT angle.
    key = jax.random.PRNGKey(0)
    N, C, F, T = 2, 4, 16, 16
    p = jax.random.uniform(
        key, (N, C, F, T), dtype=jnp.float32, minval=-jnp.pi, maxval=jnp.pi
    )

    ipd = jax.block_until_ready(ipd_feature(p, cos=True, sin=False))

    # Pure-JAX reference (mirrors the PyTorch forward exactly).
    ref = jnp.cos(p[:, 1:, :, :] - p[:, 0:1, :, :]).reshape(N, (C - 1) * F, T)
    assert ipd.shape == (N, (C - 1) * F, T), ipd.shape
    assert jnp.allclose(ipd, ref, atol=1e-5, rtol=1e-5)

    # Second case: 3D input (no batch dim), odd F, C=2 (RSAN default n_channel).
    p3 = jax.random.uniform(
        jax.random.PRNGKey(1), (2, 33, 40), dtype=jnp.float32,
        minval=-jnp.pi, maxval=jnp.pi,
    )
    ipd3 = jax.block_until_ready(ipd_feature(p3))
    ref3 = jnp.cos(p3[1:] - p3[0:1]).reshape(1, 33, 40)
    assert ipd3.shape == (1, 33, 40), ipd3.shape
    assert jnp.allclose(ipd3, ref3, atol=1e-5, rtol=1e-5)

    print("KERNEL_OK")
</pallas_src>

<mosaic_0001>
module attributes {stable_mosaic.version = 11 : i64} {
  func.func @_ipd_cos_kernel(%arg0: i32, %arg1: i32, %arg2: memref<1x4x16x16xf32, #tpu.memory_space<vmem>>, %arg3: memref<1x3x16x16xf32, #tpu.memory_space<vmem>>) attributes {dimension_semantics = [#tpu.dimension_semantics<parallel>, #tpu.dimension_semantics<parallel>], iteration_bounds = array<i64: 2, 1>, scalar_prefetch = 0 : i64, scratch_operands = 0 : i64, tpu.core_type = #tpu.core_type<tc>, window_params = [{transform_indices = @transform_0, window_bounds = array<i64: 1, 4, 16, 16>}, {transform_indices = @transform_1, window_bounds = array<i64: 1, 3, 16, 16>}]} {
    %c0 = arith.constant 0 : index
    %c0_0 = arith.constant 0 : index
    %c0_1 = arith.constant 0 : index
    %c0_2 = arith.constant 0 : index
    %0 = vector.load %arg2[%c0, %c0_0, %c0_1, %c0_2] : memref<1x4x16x16xf32, #tpu.memory_space<vmem>>, vector<1x1x16x16xf32>
    %1 = vector.shape_cast %0 : vector<1x1x16x16xf32> to vector<16x16xf32>
    %c0_3 = arith.constant 0 : index
    %c1 = arith.constant 1 : index
    %c0_4 = arith.constant 0 : index
    %c0_5 = arith.constant 0 : index
    %2 = vector.load %arg2[%c0_3, %c1, %c0_4, %c0_5] : memref<1x4x16x16xf32, #tpu.memory_space<vmem>>, vector<1x1x16x16xf32>
    %3 = vector.shape_cast %2 : vector<1x1x16x16xf32> to vector<16x16xf32>
    %4 = arith.subf %3, %1 : vector<16x16xf32>
    %5 = math.cos %4 : vector<16x16xf32>
    %c0_6 = arith.constant 0 : index
    %c0_7 = arith.constant 0 : index
    %c0_8 = arith.constant 0 : index
    %c0_9 = arith.constant 0 : index
    %6 = vector.load %arg3[%c0_6, %c0_7, %c0_8, %c0_9] : memref<1x3x16x16xf32, #tpu.memory_space<vmem>>, vector<1x1x16x16xf32>
    %7 = vector.shape_cast %6 : vector<1x1x16x16xf32> to vector<16x16xf32>
    %8 = vector.shape_cast %5 : vector<16x16xf32> to vector<1x1x16x16xf32>
    tpu.vector_store %arg3[%c0_6, %c0_7, %c0_8, %c0_9], %8 {strides = array<i32>} : memref<1x3x16x16xf32, #tpu.memory_space<vmem>>, vector<1x1x16x16xf32>,
    %c0_10 = arith.constant 0 : index
    %c2 = arith.constant 2 : index
    %c0_11 = arith.constant 0 : index
    %c0_12 = arith.constant 0 : index
    %9 = vector.load %arg2[%c0_10, %c2, %c0_11, %c0_12] : memref<1x4x16x16xf32, #tpu.memory_space<vmem>>, vector<1x1x16x16xf32>
    %10 = vector.shape_cast %9 : vector<1x1x16x16xf32> to vector<16x16xf32>
    %11 = arith.subf %10, %1 : vector<16x16xf32>
    %12 = math.cos %11 : vector<16x16xf32>
    %c0_13 = arith.constant 0 : index
    %c1_14 = arith.constant 1 : index
    %c0_15 = arith.constant 0 : index
    %c0_16 = arith.constant 0 : index
    %13 = vector.load %arg3[%c0_13, %c1_14, %c0_15, %c0_16] : memref<1x3x16x16xf32, #tpu.memory_space<vmem>>, vector<1x1x16x16xf32>
    %14 = vector.shape_cast %13 : vector<1x1x16x16xf32> to vector<16x16xf32>
    %15 = vector.shape_cast %12 : vector<16x16xf32> to vector<1x1x16x16xf32>
    tpu.vector_store %arg3[%c0_13, %c1_14, %c0_15, %c0_16], %15 {strides = array<i32>} : memref<1x3x16x16xf32, #tpu.memory_space<vmem>>, vector<1x1x16x16xf32>,
    %c0_17 = arith.constant 0 : index
    %c3 = arith.constant 3 : index
    %c0_18 = arith.constant 0 : index
    %c0_19 = arith.constant 0 : index
    %16 = vector.load %arg2[%c0_17, %c3, %c0_18, %c0_19] : memref<1x4x16x16xf32, #tpu.memory_space<vmem>>, vector<1x1x16x16xf32>
    %17 = vector.shape_cast %16 : vector<1x1x16x16xf32> to vector<16x16xf32>
    %18 = arith.subf %17, %1 : vector<16x16xf32>
    %19 = math.cos %18 : vector<16x16xf32>
    %c0_20 = arith.constant 0 : index
    %c2_21 = arith.constant 2 : index
    %c0_22 = arith.constant 0 : index
    %c0_23 = arith.constant 0 : index
    %20 = vector.load %arg3[%c0_20, %c2_21, %c0_22, %c0_23] : memref<1x3x16x16xf32, #tpu.memory_space<vmem>>, vector<1x1x16x16xf32>
    %21 = vector.shape_cast %20 : vector<1x1x16x16xf32> to vector<16x16xf32>
    %22 = vector.shape_cast %19 : vector<16x16xf32> to vector<1x1x16x16xf32>
    tpu.vector_store %arg3[%c0_20, %c2_21, %c0_22, %c0_23], %22 {strides = array<i32>} : memref<1x3x16x16xf32, #tpu.memory_space<vmem>>, vector<1x1x16x16xf32>,
    return
  }
  func.func @transform_0(%arg0: i32, %arg1: i32) -> (i32, i32, i32, i32) {
    %c0_i32 = arith.constant 0 : i32
    %c0_i32_0 = arith.constant 0 : i32
    %c0_i32_1 = arith.constant 0 : i32
    return %arg0, %c0_i32, %c0_i32_0, %arg1 : i32, i32, i32, i32
  }
  func.func @transform_1(%arg0: i32, %arg1: i32) -> (i32, i32, i32, i32) {
    %c0_i32 = arith.constant 0 : i32
    %c0_i32_0 = arith.constant 0 : i32
    %c0_i32_1 = arith.constant 0 : i32
    return %arg0, %c0_i32, %c0_i32_0, %arg1 : i32, i32, i32, i32
  }
}

</mosaic_0001>

<llo_original>
// kernel: tpu_custom_call.1
$region0: #{tpu_custom_call.1}
  #allocation0 [shape = 'u32[]', space=smem, size = 0x4, offset = 0x4, fixed_abs, tag = 'smem constant byte address 0x4 - core index']
  #allocation1 [shape = 'u32[72,128]{1,0:T(1,128)}', space=vmem, size = 0x9000, scoped, tag = 'internal scratch']
  %s0 = inlined_call_operand.hbm [shape: f32[2,4,16,16], index: 0, kind: input, shape index: {}]
  %s1 = inlined_call_operand.hbm [shape: f32[2,3,16,16], index: 1, kind: output, shape index: {}]
  %s2 = sld [smem:[#allocation0]]
  $region41: #{tpu_custom_call.1} parent=0
    _
  %s4 = ssub.s32 1, %s2
  %s5 = scalar_select 0, %s4, %s2
  $region1: #{tpu_custom_call.1} parent=0
    #allocation2 [shape = 'u8[65536]{0}', space=vmem, size = 0x10000, scoped, tag = 'input window, operand 0']
    #allocation3 [shape = 's32[2]{0}', space=sflag, size = 0x8, scoped, tag = 'scoped memory for tpu_custom_call.1']
    #allocation4 [shape = 's32[2]{0}', space=sflag, size = 0x8, scoped, tag = 'scoped memory for tpu_custom_call.1']
    #allocation5 [shape = 'u8[49152]{0}', space=vmem, size = 0xc000, scoped, tag = 'output window, operand 0']
    %6 = vsyncpa [#allocation3], 0
    %s7 = scalar_lea.sflag [#allocation3], 1
    %8 = vsyncpa %s7, 0
    %9 = vsyncpa [#allocation4], 0
    %s10 = scalar_lea.sflag [#allocation4], 1
    %11 = vsyncpa %s10, 0
    loop: start=0, step=1, limit=4
    $region2: #{tpu_custom_call.1} parent=1 // loop_pre_header
      _
    $region3: #{tpu_custom_call.1} parent=1 // loop_header
      %s13 = sphi 0, %s17
      %p14 = scmp.ge.s32.totalorder %s13, 4
      %s20 = sphi 0, %s32
      %s21 = sphi 0, %s28
      %s22 = sphi 0, %s20
      %s23 = sphi 0, %s21
      %s24 = sphi 0, %s22
      %s25 = sphi 0, %s23
      %s37 = sphi 0, %s39
      %s40 = sphi 0, %s37
      %s41 = sphi 0, %s40
      %s57 = sphi 0, %s41
      %s65 = sphi 0, %s67
      %s68 = sphi 0, %s65
      %s69 = sphi 0, %s68
      %s85 = sphi 0, %s69
    $region4: #{tpu_custom_call.1} parent=1 // loop_header_branch
      %16 = sbr.rel (%p14) target = $region8
    $region5: #{tpu_custom_call.1} parent=1 // loop_body
      %s18 = ssub.s32 %s13, 1
      %s19 = ssub.s32 %s13, 2
      %s26 = sadd.s32 1, %s21
      %p27 = scmp.ge.s32.totalorder %s26, 1
      %s28 = scalar_select %p27, 0, %s26
      %s29 = sadd.s32 1, %s20
      %s30 = scalar_select %p27, %s29, %s20
      %p31 = scmp.ge.s32.totalorder %s30, 2
      %s32 = scalar_select %p31, 0, %s30
      %s33 = ssub.s32 %s20, %s32
      %s34 = ssub.s32 %s21, %s28
      %s35 = sor.u32 %s33, %s34
      %p36 = scmp.eq.s32.totalorder %s35, 0
      %s38 = sadd.s32 %s37, 1
      %s39 = scalar_select %p36, %s37, %s38
      %p42 = pneg %p36
      %p43 = scmp.eq.s32.totalorder %s13, 1
      %p44 = por %p42, %p43
      %p45 = scmp.ne.s32.totalorder %s37, %s40
      %p46 = scmp.eq.s32.totalorder %s13, 0
      %p47 = por %p45, %p46
      %p48 = scmp.ne.s32.totalorder %s37, %s40
      %p49 = scmp.eq.s32.totalorder %s18, 1
      %p50 = por %p48, %p49
      %p51 = scmp.ne.s32.totalorder %s40, %s41
      %p52 = scmp.eq.s32.totalorder %s18, 0
      %p53 = por %p51, %p52
      %p54 = scmp.ne.s32.totalorder %s40, %s41
      %p55 = scmp.eq.s32.totalorder %s19, 1
      %p56 = por %p54, %p55
      %p58 = scmp.ne.s32.totalorder %s41, %s57
      %p59 = scmp.eq.s32.totalorder %s19, 0
      %p60 = por %p58, %p59
      %s61 = ssub.s32 %s20, %s32
      %s62 = ssub.s32 %s21, %s28
      %s63 = sor.u32 %s61, %s62
      %p64 = scmp.eq.s32.totalorder %s63, 0
      %s66 = sadd.s32 %s65, 1
      %s67 = scalar_select %p64, %s65, %s66
      %p70 = pneg %p64
      %p71 = scmp.eq.s32.totalorder %s13, 1
      %p72 = por %p70, %p71
      %p73 = scmp.ne.s32.totalorder %s65, %s68
      %p74 = scmp.eq.s32.totalorder %s13, 0
      %p75 = por %p73, %p74
      %p76 = scmp.ne.s32.totalorder %s65, %s68
      %p77 = scmp.eq.s32.totalorder %s18, 1
      %p78 = por %p76, %p77
      %p79 = scmp.ne.s32.totalorder %s68, %s69
      %p80 = scmp.eq.s32.totalorder %s18, 0
      %p81 = por %p79, %p80
      %p82 = scmp.ne.s32.totalorder %s68, %s69
      %p83 = scmp.eq.s32.totalorder %s19, 1
      %p84 = por %p82, %p83
      %p86 = scmp.ne.s32.totalorder %s69, %s85
      %p87 = scmp.eq.s32.totalorder %s19, 0
      %p88 = por %p86, %p87
      %p89 = scmp.le.s32.totalorder 1, %s13
      %p90 = scmp.lt.s32.totalorder %s13, 3
      %p91 = pnand %p89, %p90
      %p92 = pneg %p91
      // Predicated region
      $region9: #{tpu_custom_call.1} parent=5 // pred_check
        _
      $region10: #{tpu_custom_call.1} parent=5 // pred_check_branch
        %94 = sbr.rel (%p91) target = $region12
      $region11: #{tpu_custom_call.1} parent=5 // pred_region
        %s95 = ssub.s32 %s13, 1
      $region12: #{tpu_custom_call.1} parent=5 // pred_fallthru
        _
      %p96 = scmp.lt.s32.totalorder %s13, 2
      // Predicated region
      $region13: #{tpu_custom_call.1} parent=5 // pred_check
        %p97 = pneg %p96
      $region14: #{tpu_custom_call.1} parent=5 // pred_check_branch
        %99 = sbr.rel (%p97) target = $region16
      $region15: #{tpu_custom_call.1} parent=5 // pred_region
        // Predicated region
        $region17: #{tpu_custom_call.1} parent=15 // pred_check
          %p100 = pneg %p47
        $region18: #{tpu_custom_call.1} parent=15 // pred_check_branch
          %102 = sbr.rel (%p100) target = $region20
        $region19: #{tpu_custom_call.1} parent=15 // pred_region
          %s103 = sand.u32 %s37, 1
          %s104 = scalar_lea.sflag [#allocation3], %s103
          %s105 = sand.u32 %s37, 1
          %s106 = smul.addr %s105, 64
          %s107 = scalar_lea.vmem [#allocation2], %s106
          %109 = vsyncadd %s104, 0
          %s110 = smul.addr %s20, 8
          %s111 = sadd.s32 %s21, %s110
          %s112 = smul.addr %s111, 8
          %s113 = scalar_lea.hbm %s0, %s112
          %s114 = sshll.u32 %s113, 4
          %s115 = int_to_ptr.hbm [resolvable:$true] %s114
          %s116 = sshll.u32 %s107, 4
          %s117 = int_to_ptr.vmem [resolvable:$true] %s116
          %122 = dma.hbm_to_vmem [thread:$0]  %s115, 1024, %s117, %s104, 128, 128, 8
        $region20: #{tpu_custom_call.1} parent=15 // pred_fallthru
          _
      $region16: #{tpu_custom_call.1} parent=5 // pred_fallthru
        _
      %p123 = scmp.le.s32.totalorder 1, %s13
      %p124 = scmp.lt.s32.totalorder %s13, 3
      %p125 = pnand %p123, %p124
      %p126 = pneg %p125
      // Predicated region
      $region21: #{tpu_custom_call.1} parent=5 // pred_check
        _
      $region22: #{tpu_custom_call.1} parent=5 // pred_check_branch
        %128 = sbr.rel (%p125) target = $region24
      $region23: #{tpu_custom_call.1} parent=5 // pred_region
        %s129 = ssub.s32 %s13, 1
        %s130 = sand.u32 %s40, 1
        %s131 = scalar_lea.sflag [#allocation3], %s130
        %s132 = sand.u32 %s40, 1
        %s133 = smul.addr %s132, 64
        %s134 = scalar_lea.vmem [#allocation2], %s133
        // Predicated region
        $region25: #{tpu_custom_call.1} parent=23 // pred_check
          %p135 = pneg %p53
        $region26: #{tpu_custom_call.1} parent=23 // pred_check_branch
          %137 = sbr.rel (%p135) target = $region28
        $region27: #{tpu_custom_call.1} parent=23 // pred_region
          %139 = dma.done %s131, 1024
        $region28: #{tpu_custom_call.1} parent=23 // pred_fallthru
          _
        %s140 = sand.u32 %s40, 1
        %s141 = scalar_lea.sflag [#allocation3], %s140
        %s142 = sand.u32 %s40, 1
        %s143 = smul.addr %s142, 64
        %s144 = scalar_lea.vmem [#allocation2], %s143
        %p145 = pneg %p53
        %p146 = pneg %p50
        %p147 = pneg %p81
        %p148 = pneg %p78
        %s149 = sand.u32 %s68, 1
        %s150 = scalar_lea.sflag [#allocation4], %s149
        %s151 = sand.u32 %s68, 1
        %s152 = smul.addr %s151, 48
        %s153 = scalar_lea.vmem [#allocation5], %s152
        %v154 = vld [vmem:[%s134] sm:$0xff]
        %v155 = vld [vmem:[%s134 + $0x8] sm:$0xff]
        %s156 = scalar_lea.vmem %s134, 16 [#allocation2]
        %v157 = vld [vmem:[%s156] sm:$0xff]
        %v158 = vld [vmem:[%s156 + $0x8] sm:$0xff]
        %v159 = vsub.f32 %v157, %v154
        %v160 = vsub.f32 %v158, %v155
        %v161 = vand.u32 2147483647, %v159
        %vm162 = vcmp.le.f32.partialorder %v161, 0.7853982
        %vm163 = vcmp.lt.s32.totalorder %v159, 0
        %v164 = vand.u32 %v159, 2139095040
        %v165 = vshrl.u32 %v164, 23
        %v166 = vsub.s32 %v165, 127
        %v167 = vand.u32 2147483647, %v159
        %v168 = vand.u32 %v167, 8388607
        %v169 = vor.u32 %v168, 8388608
        %v170 = vsub.s32 0, %v169
        %v171 = vadd.s32 %v166, 1
        %vm172 = vcmp.gt.s32.totalorder %v171, 0
        %v173 = vsel %vm172, %v171, 0
        %v174 = vshrl.u32 %v173, 5
        %v175 = vand.u32 %v173, 31
        %v176 = vsub.s32 32, %v175
        %v177 = vshrl.u32 683565275, %v176
        %v178 = vshll.u32 683565275, %v175
        %v179 = vshrl.u32 2475754826, %v176
        %v180 = vor.u32 %v178, %v179
        %v181 = vshll.u32 2475754826, %v175
        %v182 = vshrl.u32 2131351028, %v176
        %v183 = vor.u32 %v181, %v182
        %v184 = vshll.u32 2131351028, %v175
        %v185 = vshrl.u32 2102212464, %v176
        %v186 = vor.u32 %v184, %v185
        %v187 = vshll.u32 2102212464, %v175
        %v188 = vshrl.u32 920167782, %v176
        %v189 = vor.u32 %v187, %v188
        %v190 = vshll.u32 920167782, %v175
        %v191 = vshrl.u32 1326507024, %v176
        %v192 = vor.u32 %v190, %v191
        %vm193 = vcmp.lt.s32.totalorder %v174, 1
        %vm194 = vcmp.lt.s32.totalorder %v174, 2
        %vm195 = vcmp.lt.s32.totalorder %v174, 3
        %vm196 = vcmp.lt.s32.totalorder %v174, 4
        %v197 = vsel %vm193, %v177, %v180
        %v198 = vsel %vm196, %v186, 2102212464
        %v199 = vsel %vm195, %v183, %v198
        %v200 = vsel %vm194, %v197, %v199
        %v201 = vsel %vm193, %v180, %v183
        %v202 = vsel %vm196, %v189, 920167782
        %v203 = vsel %vm195, %v186, %v202
        %v204 = vsel %vm194, %v201, %v203
        %v205 = vsel %vm193, %v183, %v186
        %v206 = vsel %vm196, %v192, 1326507024
        %v207 = vsel %vm195, %v189, %v206
        %v208 = vsel %vm194, %v205, %v207
        %v209 = vshll.u32 %v169, 8
        %v210 = vand.u32 %v209, 65535
        %v211 = vshrl.u32 %v209, 16
        %v212 = vand.u32 %v208, 65535
        %v213 = vshrl.u32 %v208, 16
        %v214 = vmul.u32 %v210, %v212
        %v215 = vmul.u32 %v210, %v213
        %v216 = vmul.u32 %v211, %v212
        %v217 = vmul.u32 %v211, %v213
        %v218 = vshll.u32 %v215, 16
        %v219 = vshrl.u32 %v215, 16
        %v220 = vshll.u32 %v216, 16
        %v221 = vshrl.u32 %v216, 16
        %vm222 = vc.u32 %v214, %v218
        %v223 = vsel %vm222, 1, 0
        %v224 = vadd.s32 %v214, %v218
        %v225 = vadd.s32 %v217, %v223
        %vm226 = vc.u32 %v224, %v220
        %v227 = vsel %vm226, 1, 0
        %v228 = vadd.s32 %v224, %v220
        %v229 = vadd.s32 %v225, %v227
        %v230 = vadd.s32 %v229, %v219
        %v231 = vadd.s32 %v230, %v221
        %v232 = vand.u32 %v209, 65535
        %v233 = vshrl.u32 %v209, 16
        %v234 = vand.u32 %v204, 65535
        %v235 = vshrl.u32 %v204, 16
        %v236 = vmul.u32 %v232, %v234
        %v237 = vmul.u32 %v232, %v235
        %v238 = vmul.u32 %v233, %v234
        %v239 = vmul.u32 %v233, %v235
        %v240 = vshll.u32 %v237, 16
        %v241 = vshrl.u32 %v237, 16
        %v242 = vshll.u32 %v238, 16
        %v243 = vshrl.u32 %v238, 16
        %vm244 = vc.u32 %v236, %v240
        %v245 = vsel %vm244, 1, 0
        %v246 = vadd.s32 %v236, %v240
        %v247 = vadd.s32 %v239, %v245
        %vm248 = vc.u32 %v246, %v242
        %v249 = vsel %vm248, 1, 0
        %v250 = vadd.s32 %v246, %v242
        %v251 = vadd.s32 %v247, %v249
        %v252 = vadd.s32 %v251, %v241
        %v253 = vadd.s32 %v252, %v243
        %v254 = vmul.u32 %v209, %v200
        %v255 = vadd.s32 %v231, %v250
        %vm256 = vc.u32 %v231, %v250
        %v257 = vadd.s32 %v253, 1
        %v258 = vsel %vm256, %v257, %v253
        %v259 = vadd.s32 %v254, %v258
        %v260 = vadd.s32 %v259, 536870912
        %v261 = vshrl.u32 %v260, 30
        %v262 = vshll.u32 %v261, 30
        %v263 = vsub.s32 %v259, %v262
        %vm264 = vcmp.lt.s32.totalorder %v263, 0
        %v265 = vsub.s32 0, %v263
        %v266 = vsel %vm264, %v265, %v263
        %v267 = vclz %v266
        %v268 = vsub.s32 %v267, 2
        %vm269 = vcmp.gt.s32.totalorder 0, %v268
        %v270 = vsel %vm269, 0, %v268
        %v271 = vsub.s32 32, %v270
        %v272 = vshll.u32 %v263, %v270
        %v273 = vshrl.u32 %v255, %v271
        %v274 = vor.u32 %v272, %v273
        %v275 = vsub.s32 4294967266, %v270
        %v276 = vadd.s32 %v275, 127
        %v277 = vshll.u32 %v276, 23
        %v278 = vor.u32 4788187, %v277
        %v279 = vand.u32 2147483647, %v278
        %v281 = vcvt.s32.f32 %v274
        %v282 = vmul.f32 %v281, %v279
        %v283 = vxor.u32 %v282, 2147483648
        %v284 = vsel %vm163, %v283, %v282
        %v285 = vsub.s32 4, %v261
        %v286 = vsel %vm163, %v285, %v261
        %v287 = vsel %vm162, %v159, %v284
        %v288 = vsel %vm162, 0, %v286
        %v289 = vmul.f32 %v287, %v287
        %v290 = vmul.f32 %v289, -0.001358992
        %v291 = vadd.f32 %v290, 0.041655596
        %v292 = vmul.f32 %v289, %v291
        %v293 = vadd.f32 %v292, -0.4999988
        %v294 = vmul.f32 %v289, %v293
        %v295 = vadd.f32 1.0, %v294
        %v296 = vmul.f32 %v287, %v287
        %v297 = vmul.f32 %v296, -0.00019511016
        %v298 = vadd.f32 %v297, 0.008332121
        %v299 = vmul.f32 %v296, %v298
        %v300 = vadd.f32 %v299, -0.16666654
        %v301 = vmul.f32 %v296, %v300
        %v302 = vadd.f32 %v301, 1.0
        %v303 = vmul.f32 %v302, %v287
        %vm304 = vweird.f32 %v159
        %v305 = vand.u32 %v288, 3
        %vm306 = vcmp.lt.s32.totalorder %v305, 2
        %vm307 = vcmp.eq.s32.totalorder %v305, 0
        %v308 = vxor.u32 %v303, 2147483648
        %v309 = vsel %vm307, %v295, %v308
        %vm310 = vcmp.eq.s32.totalorder %v305, 2
        %v311 = vxor.u32 %v295, 2147483648
        %v312 = vsel %vm310, %v311, %v303
        %v313 = vsel %vm306, %v309, %v312
        %v314 = vsel %vm304, nan, %v313
        %v315 = vand.u32 2147483647, %v160
        %vm316 = vcmp.le.f32.partialorder %v315, 0.7853982
        %vm317 = vcmp.lt.s32.totalorder %v160, 0
        %v318 = vand.u32 %v160, 2139095040
        %v319 = vshrl.u32 %v318, 23
        %v320 = vsub.s32 %v319, 127
        %v321 = vand.u32 2147483647, %v160
        %v322 = vand.u32 %v321, 8388607
        %v323 = vor.u32 %v322, 8388608
        %v324 = vsub.s32 0, %v323
        %v325 = vadd.s32 %v320, 1
        %vm326 = vcmp.gt.s32.totalorder %v325, 0
        %v327 = vsel %vm326, %v325, 0
        %v328 = vshrl.u32 %v327, 5
        %v329 = vand.u32 %v327, 31
        %v330 = vsub.s32 32, %v329
        %v331 = vshrl.u32 683565275, %v330
        %v332 = vshll.u32 683565275, %v329
        %v333 = vshrl.u32 2475754826, %v330
        %v334 = vor.u32 %v332, %v333
        %v335 = vshll.u32 2475754826, %v329
        %v336 = vshrl.u32 2131351028, %v330
        %v337 = vor.u32 %v335, %v336
        %v338 = vshll.u32 2131351028, %v329
        %v339 = vshrl.u32 2102212464, %v330
        %v340 = vor.u32 %v338, %v339
        %v341 = vshll.u32 2102212464, %v329
        %v342 = vshrl.u32 920167782, %v330
        %v343 = vor.u32 %v341, %v342
        %v344 = vshll.u32 920167782, %v329
        %v345 = vshrl.u32 1326507024, %v330
        %v346 = vor.u32 %v344, %v345
        %vm347 = vcmp.lt.s32.totalorder %v328, 1
        %vm348 = vcmp.lt.s32.totalorder %v328, 2
        %vm349 = vcmp.lt.s32.totalorder %v328, 3
        %vm350 = vcmp.lt.s32.totalorder %v328, 4
        %v351 = vsel %vm347, %v331, %v334
        %v352 = vsel %vm350, %v340, 2102212464
        %v353 = vsel %vm349, %v337, %v352
        %v354 = vsel %vm348, %v351, %v353
        %v355 = vsel %vm347, %v334, %v337
        %v356 = vsel %vm350, %v343, 920167782
        %v357 = vsel %vm349, %v340, %v356
        %v358 = vsel %vm348, %v355, %v357
        %v359 = vsel %vm347, %v337, %v340
        %v360 = vsel %vm350, %v346, 1326507024
        %v361 = vsel %vm349, %v343, %v360
        %v362 = vsel %vm348, %v359, %v361
        %v363 = vshll.u32 %v323, 8
        %v364 = vand.u32 %v363, 65535
        %v365 = vshrl.u32 %v363, 16
        %v366 = vand.u32 %v362, 65535
        %v367 = vshrl.u32 %v362, 16
        %v368 = vmul.u32 %v364, %v366
        %v369 = vmul.u32 %v364, %v367
        %v370 = vmul.u32 %v365, %v366
        %v371 = vmul.u32 %v365, %v367
        %v372 = vshll.u32 %v369, 16
        %v373 = vshrl.u32 %v369, 16
        %v374 = vshll.u32 %v370, 16
        %v375 = vshrl.u32 %v370, 16
        %vm376 = vc.u32 %v368, %v372
        %v377 = vsel %vm376, 1, 0
        %v378 = vadd.s32 %v368, %v372
        %v379 = vadd.s32 %v371, %v377
        %vm380 = vc.u32 %v378, %v374
        %v381 = vsel %vm380, 1, 0
        %v382 = vadd.s32 %v378, %v374
        %v383 = vadd.s32 %v379, %v381
        %v384 = vadd.s32 %v383, %v373
        %v385 = vadd.s32 %v384, %v375
        %v386 = vand.u32 %v363, 65535
        %v387 = vshrl.u32 %v363, 16
        %v388 = vand.u32 %v358, 65535
        %v389 = vshrl.u32 %v358, 16
        %v390 = vmul.u32 %v386, %v388
        %v391 = vmul.u32 %v386, %v389
        %v392 = vmul.u32 %v387, %v388
        %v393 = vmul.u32 %v387, %v389
        %v394 = vshll.u32 %v391, 16
        %v395 = vshrl.u32 %v391, 16
        %v396 = vshll.u32 %v392, 16
        %v397 = vshrl.u32 %v392, 16
        %vm398 = vc.u32 %v390, %v394
        %v399 = vsel %vm398, 1, 0
        %v400 = vadd.s32 %v390, %v394
        %v401 = vadd.s32 %v393, %v399
        %vm402 = vc.u32 %v400, %v396
        %v403 = vsel %vm402, 1, 0
        %v404 = vadd.s32 %v400, %v396
        %v405 = vadd.s32 %v401, %v403
        %v406 = vadd.s32 %v405, %v395
        %v407 = vadd.s32 %v406, %v397
        %v408 = vmul.u32 %v363, %v354
        %v409 = vadd.s32 %v385, %v404
        %vm410 = vc.u32 %v385, %v404
        %v411 = vadd.s32 %v407, 1
        %v412 = vsel %vm410, %v411, %v407
        %v413 = vadd.s32 %v408, %v412
        %v414 = vadd.s32 %v413, 536870912
        %v415 = vshrl.u32 %v414, 30
        %v416 = vshll.u32 %v415, 30
        %v417 = vsub.s32 %v413, %v416
        %vm418 = vcmp.lt.s32.totalorder %v417, 0
        %v419 = vsub.s32 0, %v417
        %v420 = vsel %vm418, %v419, %v417
        %v421 = vclz %v420
        %v422 = vsub.s32 %v421, 2
        %vm423 = vcmp.gt.s32.totalorder 0, %v422
        %v424 = vsel %vm423, 0, %v422
        %v425 = vsub.s32 32, %v424
        %v426 = vshll.u32 %v417, %v424
        %v427 = vshrl.u32 %v409, %v425
        %v428 = vor.u32 %v426, %v427
        %v429 = vsub.s32 4294967266, %v424
        %v430 = vadd.s32 %v429, 127
        %v431 = vshll.u32 %v430, 23
        %v432 = vor.u32 4788187, %v431
        %v433 = vand.u32 2147483647, %v432
        %v435 = vcvt.s32.f32 %v428
        %v436 = vmul.f32 %v435, %v433
        %v437 = vxor.u32 %v436, 2147483648
        %v438 = vsel %vm317, %v437, %v436
        %v439 = vsub.s32 4, %v415
        %v440 = vsel %vm317, %v439, %v415
        %v441 = vsel %vm316, %v160, %v438
        %v442 = vsel %vm316, 0, %v440
        %v443 = vmul.f32 %v441, %v441
        %v444 = vmul.f32 %v443, -0.001358992
        %v445 = vadd.f32 %v444, 0.041655596
        %v446 = vmul.f32 %v443, %v445
        %v447 = vadd.f32 %v446, -0.4999988
        %v448 = vmul.f32 %v443, %v447
        %v449 = vadd.f32 1.0, %v448
        %v450 = vmul.f32 %v441, %v441
        %v451 = vmul.f32 %v450, -0.00019511016
        %v452 = vadd.f32 %v451, 0.008332121
        %v453 = vmul.f32 %v450, %v452
        %v454 = vadd.f32 %v453, -0.16666654
        %v455 = vmul.f32 %v450, %v454
        %v456 = vadd.f32 %v455, 1.0
        %v457 = vmul.f32 %v456, %v441
        %vm458 = vweird.f32 %v160
        %v459 = vand.u32 %v442, 3
        %vm460 = vcmp.lt.s32.totalorder %v459, 2
        %vm461 = vcmp.eq.s32.totalorder %v459, 0
        %v462 = vxor.u32 %v457, 2147483648
        %v463 = vsel %vm461, %v449, %v462
        %vm464 = vcmp.eq.s32.totalorder %v459, 2
        %v465 = vxor.u32 %v449, 2147483648
        %v466 = vsel %vm464, %v465, %v457
        %v467 = vsel %vm460, %v463, %v466
        %v468 = vsel %vm458, nan, %v467
        %vm469 = vcmask 130048
        %470 = vst.msk [vmem:[%s153] sm:$0xff] %vm469, %v314
        %471 = vst.msk [vmem:[%s153 + $0x8] sm:$0xff] %vm469, %v468
        %s472 = scalar_lea.vmem %s134, 32 [#allocation2]
        %v473 = vld [vmem:[%s472] sm:$0xff]
        %v474 = vld [vmem:[%s472 + $0x8] sm:$0xff]
        %v475 = vsub.f32 %v473, %v154
        %v476 = vsub.f32 %v474, %v155
        %v477 = vand.u32 2147483647, %v475
        %vm478 = vcmp.le.f32.partialorder %v477, 0.7853982
        %vm479 = vcmp.lt.s32.totalorder %v475, 0
        %v480 = vand.u32 %v475, 2139095040
        %v481 = vshrl.u32 %v480, 23
        %v482 = vsub.s32 %v481, 127
        %v483 = vand.u32 2147483647, %v475
        %v484 = vand.u32 %v483, 8388607
        %v485 = vor.u32 %v484, 8388608
        %v486 = vsub.s32 0, %v485
        %v487 = vadd.s32 %v482, 1
        %vm488 = vcmp.gt.s32.totalorder %v487, 0
        %v489 = vsel %vm488, %v487, 0
        %v490 = vshrl.u32 %v489, 5
        %v491 = vand.u32 %v489, 31
        %v492 = vsub.s32 32, %v491
        %v493 = vshrl.u32 683565275, %v492
        %v494 = vshll.u32 683565275, %v491
        %v495 = vshrl.u32 2475754826, %v492
        %v496 = vor.u32 %v494, %v495
        %v497 = vshll.u32 2475754826, %v491
        %v498 = vshrl.u32 2131351028, %v492
        %v499 = vor.u32 %v497, %v498
        %v500 = vshll.u32 2131351028, %v491
        %v501 = vshrl.u32 2102212464, %v492
        %v502 = vor.u32 %v500, %v501
        %v503 = vshll.u32 2102212464, %v491
        %v504 = vshrl.u32 920167782, %v492
        %v505 = vor.u32 %v503, %v504
        %v506 = vshll.u32 920167782, %v491
        %v507 = vshrl.u32 1326507024, %v492
        %v508 = vor.u32 %v506, %v507
        %vm509 = vcmp.lt.s32.totalorder %v490, 1
        %vm510 = vcmp.lt.s32.totalorder %v490, 2
        %vm511 = vcmp.lt.s32.totalorder %v490, 3
        %vm512 = vcmp.lt.s32.totalorder %v490, 4
        %v513 = vsel %vm509, %v493, %v496
        %v514 = vsel %vm512, %v502, 2102212464
        %v515 = vsel %vm511, %v499, %v514
        %v516 = vsel %vm510, %v513, %v515
        %v517 = vsel %vm509, %v496, %v499
        %v518 = vsel %vm512, %v505, 920167782
        %v519 = vsel %vm511, %v502, %v518
        %v520 = vsel %vm510, %v517, %v519
        %v521 = vsel %vm509, %v499, %v502
        %v522 = vsel %vm512, %v508, 1326507024
        %v523 = vsel %vm511, %v505, %v522
        %v524 = vsel %vm510, %v521, %v523
        %v525 = vshll.u32 %v485, 8
        %v526 = vand.u32 %v525, 65535
        %v527 = vshrl.u32 %v525, 16
        %v528 = vand.u32 %v524, 65535
        %v529 = vshrl.u32 %v524, 16
        %v530 = vmul.u32 %v526, %v528
        %v531 = vmul.u32 %v526, %v529
        %v532 = vmul.u32 %v527, %v528
        %v533 = vmul.u32 %v527, %v529
        %v534 = vshll.u32 %v531, 16
        %v535 = vshrl.u32 %v531, 16
        %v536 = vshll.u32 %v532, 16
        %v537 = vshrl.u32 %v532, 16
        %vm538 = vc.u32 %v530, %v534
        %v539 = vsel %vm538, 1, 0
        %v540 = vadd.s32 %v530, %v534
        %v541 = vadd.s32 %v533, %v539
        %vm542 = vc.u32 %v540, %v536
        %v543 = vsel %vm542, 1, 0
        %v544 = vadd.s32 %v540, %v536
        %v545 = vadd.s32 %v541, %v543
        %v546 = vadd.s32 %v545, %v535
        %v547 = vadd.s32 %v546, %v537
        %v548 = vand.u32 %v525, 65535
        %v549 = vshrl.u32 %v525, 16
        %v550 = vand.u32 %v520, 65535
        %v551 = vshrl.u32 %v520, 16
        %v552 = vmul.u32 %v548, %v550
        %v553 = vmul.u32 %v548, %v551
        %v554 = vmul.u32 %v549, %v550
        %v555 = vmul.u32 %v549, %v551
        %v556 = vshll.u32 %v553, 16
        %v557 = vshrl.u32 %v553, 16
        %v558 = vshll.u32 %v554, 16
        %v559 = vshrl.u32 %v554, 16
        %vm560 = vc.u32 %v552, %v556
        %v561 = vsel %vm560, 1, 0
        %v562 = vadd.s32 %v552, %v556
        %v563 = vadd.s32 %v555, %v561
        %vm564 = vc.u32 %v562, %v558
        %v565 = vsel %vm564, 1, 0
        %v566 = vadd.s32 %v562, %v558
        %v567 = vadd.s32 %v563, %v565
        %v568 = vadd.s32 %v567, %v557
        %v569 = vadd.s32 %v568, %v559
        %v570 = vmul.u32 %v525, %v516
        %v571 = vadd.s32 %v547, %v566
        %vm572 = vc.u32 %v547, %v566
        %v573 = vadd.s32 %v569, 1
        %v574 = vsel %vm572, %v573, %v569
        %v575 = vadd.s32 %v570, %v574
        %v576 = vadd.s32 %v575, 536870912
        %v577 = vshrl.u32 %v576, 30
        %v578 = vshll.u32 %v577, 30
        %v579 = vsub.s32 %v575, %v578
        %vm580 = vcmp.lt.s32.totalorder %v579, 0
        %v581 = vsub.s32 0, %v579
        %v582 = vsel %vm580, %v581, %v579
        %v583 = vclz %v582
        %v584 = vsub.s32 %v583, 2
        %vm585 = vcmp.gt.s32.totalorder 0, %v584
        %v586 = vsel %vm585, 0, %v584
        %v587 = vsub.s32 32, %v586
        %v588 = vshll.u32 %v579, %v586
        %v589 = vshrl.u32 %v571, %v587
        %v590 = vor.u32 %v588, %v589
        %v591 = vsub.s32 4294967266, %v586
        %v592 = vadd.s32 %v591, 127
        %v593 = vshll.u32 %v592, 23
        %v594 = vor.u32 4788187, %v593
        %v595 = vand.u32 2147483647, %v594
        %v597 = vcvt.s32.f32 %v590
        %v598 = vmul.f32 %v597, %v595
        %v599 = vxor.u32 %v598, 2147483648
        %v600 = vsel %vm479, %v599, %v598
        %v601 = vsub.s32 4, %v577
        %v602 = vsel %vm479, %v601, %v577
        %v603 = vsel %vm478, %v475, %v600
        %v604 = vsel %vm478, 0, %v602
        %v605 = vmul.f32 %v603, %v603
        %v606 = vmul.f32 %v605, -0.001358992
        %v607 = vadd.f32 %v606, 0.041655596
        %v608 = vmul.f32 %v605, %v607
        %v609 = vadd.f32 %v608, -0.4999988
        %v610 = vmul.f32 %v605, %v609
        %v611 = vadd.f32 1.0, %v610
        %v612 = vmul.f32 %v603, %v603
        %v613 = vmul.f32 %v612, -0.00019511016
        %v614 = vadd.f32 %v613, 0.008332121
        %v615 = vmul.f32 %v612, %v614
        %v616 = vadd.f32 %v615, -0.16666654
        %v617 = vmul.f32 %v612, %v616
        %v618 = vadd.f32 %v617, 1.0
        %v619 = vmul.f32 %v618, %v603
        %vm620 = vweird.f32 %v475
        %v621 = vand.u32 %v604, 3
        %vm622 = vcmp.lt.s32.totalorder %v621, 2
        %vm623 = vcmp.eq.s32.totalorder %v621, 0
        %v624 = vxor.u32 %v619, 2147483648
        %v625 = vsel %vm623, %v611, %v624
        %vm626 = vcmp.eq.s32.totalorder %v621, 2
        %v627 = vxor.u32 %v611, 2147483648
        %v628 = vsel %vm626, %v627, %v619
        %v629 = vsel %vm622, %v625, %v628
        %v630 = vsel %vm620, nan, %v629
        %v631 = vand.u32 2147483647, %v476
        %vm632 = vcmp.le.f32.partialorder %v631, 0.7853982
        %vm633 = vcmp.lt.s32.totalorder %v476, 0
        %v634 = vand.u32 %v476, 2139095040
        %v635 = vshrl.u32 %v634, 23
        %v636 = vsub.s32 %v635, 127
        %v637 = vand.u32 2147483647, %v476
        %v638 = vand.u32 %v637, 8388607
        %v639 = vor.u32 %v638, 8388608
        %v640 = vsub.s32 0, %v639
        %v641 = vadd.s32 %v636, 1
        %vm642 = vcmp.gt.s32.totalorder %v641, 0
        %v643 = vsel %vm642, %v641, 0
        %v644 = vshrl.u32 %v643, 5
        %v645 = vand.u32 %v643, 31
        %v646 = vsub.s32 32, %v645
        %v647 = vshrl.u32 683565275, %v646
        %v648 = vshll.u32 683565275, %v645
        %v649 = vshrl.u32 2475754826, %v646
        %v650 = vor.u32 %v648, %v649
        %v651 = vshll.u32 2475754826, %v645
        %v652 = vshrl.u32 2131351028, %v646
        %v653 = vor.u32 %v651, %v652
        %v654 = vshll.u32 2131351028, %v645
        %v655 = vshrl.u32 2102212464, %v646
        %v656 = vor.u32 %v654, %v655
        %v657 = vshll.u32 2102212464, %v645
        %v658 = vshrl.u32 920167782, %v646
        %v659 = vor.u32 %v657, %v658
        %v660 = vshll.u32 920167782, %v645
        %v661 = vshrl.u32 1326507024, %v646
        %v662 = vor.u32 %v660, %v661
        %vm663 = vcmp.lt.s32.totalorder %v644, 1
        %vm664 = vcmp.lt.s32.totalorder %v644, 2
        %vm665 = vcmp.lt.s32.totalorder %v644, 3
        %vm666 = vcmp.lt.s32.totalorder %v644, 4
        %v667 = vsel %vm663, %v647, %v650
        %v668 = vsel %vm666, %v656, 2102212464
        %v669 = vsel %vm665, %v653, %v668
        %v670 = vsel %vm664, %v667, %v669
        %v671 = vsel %vm663, %v650, %v653
        %v672 = vsel %vm666, %v659, 920167782
        %v673 = vsel %vm665, %v656, %v672
        %v674 = vsel %vm664, %v671, %v673
        %v675 = vsel %vm663, %v653, %v656
        %v676 = vsel %vm666, %v662, 1326507024
        %v677 = vsel %vm665, %v659, %v676
        %v678 = vsel %vm664, %v675, %v677
        %v679 = vshll.u32 %v639, 8
        %v680 = vand.u32 %v679, 65535
        %v681 = vshrl.u32 %v679, 16
        %v682 = vand.u32 %v678, 65535
        %v683 = vshrl.u32 %v678, 16
        %v684 = vmul.u32 %v680, %v682
        %v685 = vmul.u32 %v680, %v683
        %v686 = vmul.u32 %v681, %v682
        %v687 = vmul.u32 %v681, %v683
        %v688 = vshll.u32 %v685, 16
        %v689 = vshrl.u32 %v685, 16
        %v690 = vshll.u32 %v686, 16
        %v691 = vshrl.u32 %v686, 16
        %vm692 = vc.u32 %v684, %v688
        %v693 = vsel %vm692, 1, 0
        %v694 = vadd.s32 %v684, %v688
        %v695 = vadd.s32 %v687, %v693
        %vm696 = vc.u32 %v694, %v690
        %v697 = vsel %vm696, 1, 0
        %v698 = vadd.s32 %v694, %v690
        %v699 = vadd.s32 %v695, %v697
        %v700 = vadd.s32 %v699, %v689
        %v701 = vadd.s32 %v700, %v691
        %v702 = vand.u32 %v679, 65535
        %v703 = vshrl.u32 %v679, 16
        %v704 = vand.u32 %v674, 65535
        %v705 = vshrl.u32 %v674, 16
        %v706 = vmul.u32 %v702, %v704
        %v707 = vmul.u32 %v702, %v705
        %v708 = vmul.u32 %v703, %v704
        %v709 = vmul.u32 %v703, %v705
        %v710 = vshll.u32 %v707, 16
        %v711 = vshrl.u32 %v707, 16
        %v712 = vshll.u32 %v708, 16
        %v713 = vshrl.u32 %v708, 16
        %vm714 = vc.u32 %v706, %v710
        %v715 = vsel %vm714, 1, 0
        %v716 = vadd.s32 %v706, %v710
        %v717 = vadd.s32 %v709, %v715
        %vm718 = vc.u32 %v716, %v712
        %v719 = vsel %vm718, 1, 0
        %v720 = vadd.s32 %v716, %v712
        %v721 = vadd.s32 %v717, %v719
        %v722 = vadd.s32 %v721, %v711
        %v723 = vadd.s32 %v722, %v713
        %v724 = vmul.u32 %v679, %v670
        %v725 = vadd.s32 %v701, %v720
        %vm726 = vc.u32 %v701, %v720
        %v727 = vadd.s32 %v723, 1
        %v728 = vsel %vm726, %v727, %v723
        %v729 = vadd.s32 %v724, %v728
        %v730 = vadd.s32 %v729, 536870912
        %v731 = vshrl.u32 %v730, 30
        %v732 = vshll.u32 %v731, 30
        %v733 = vsub.s32 %v729, %v732
        %vm734 = vcmp.lt.s32.totalorder %v733, 0
        %v735 = vsub.s32 0, %v733
        %v736 = vsel %vm734, %v735, %v733
        %v737 = vclz %v736
        %v738 = vsub.s32 %v737, 2
        %vm739 = vcmp.gt.s32.totalorder 0, %v738
        %v740 = vsel %vm739, 0, %v738
        %v741 = vsub.s32 32, %v740
        %v742 = vshll.u32 %v733, %v740
        %v743 = vshrl.u32 %v725, %v741
        %v744 = vor.u32 %v742, %v743
        %v745 = vsub.s32 4294967266, %v740
        %v746 = vadd.s32 %v745, 127
        %v747 = vshll.u32 %v746, 23
        %v748 = vor.u32 4788187, %v747
        %v749 = vand.u32 2147483647, %v748
        %v751 = vcvt.s32.f32 %v744
        %v752 = vmul.f32 %v751, %v749
        %v753 = vxor.u32 %v752, 2147483648
        %v754 = vsel %vm633, %v753, %v752
        %v755 = vsub.s32 4, %v731
        %v756 = vsel %vm633, %v755, %v731
        %v757 = vsel %vm632, %v476, %v754
        %v758 = vsel %vm632, 0, %v756
        %v759 = vmul.f32 %v757, %v757
        %v760 = vmul.f32 %v759, -0.001358992
        %v761 = vadd.f32 %v760, 0.041655596
        %v762 = vmul.f32 %v759, %v761
        %v763 = vadd.f32 %v762, -0.4999988
        %v764 = vmul.f32 %v759, %v763
        %v765 = vadd.f32 1.0, %v764
        %v766 = vmul.f32 %v757, %v757
        %v767 = vmul.f32 %v766, -0.00019511016
        %v768 = vadd.f32 %v767, 0.008332121
        %v769 = vmul.f32 %v766, %v768
        %v770 = vadd.f32 %v769, -0.16666654
        %v771 = vmul.f32 %v766, %v770
        %v772 = vadd.f32 %v771, 1.0
        %v773 = vmul.f32 %v772, %v757
        %vm774 = vweird.f32 %v476
        %v775 = vand.u32 %v758, 3
        %vm776 = vcmp.lt.s32.totalorder %v775, 2
        %vm777 = vcmp.eq.s32.totalorder %v775, 0
        %v778 = vxor.u32 %v773, 2147483648
        %v779 = vsel %vm777, %v765, %v778
        %vm780 = vcmp.eq.s32.totalorder %v775, 2
        %v781 = vxor.u32 %v765, 2147483648
        %v782 = vsel %vm780, %v781, %v773
        %v783 = vsel %vm776, %v779, %v782
        %v784 = vsel %vm774, nan, %v783
        %s785 = scalar_lea.vmem %s153, 16 [#allocation5]
        %786 = vst.msk [vmem:[%s785] sm:$0xff] %vm469, %v630
        %787 = vst.msk [vmem:[%s785 + $0x8] sm:$0xff] %vm469, %v784
        %s788 = scalar_lea.vmem %s134, 48 [#allocation2]
        %v789 = vld [vmem:[%s788] sm:$0xff]
        %v790 = vld [vmem:[%s788 + $0x8] sm:$0xff]
        %v791 = vsub.f32 %v789, %v154
        %v792 = vsub.f32 %v790, %v155
        %v793 = vand.u32 2147483647, %v791
        %vm794 = vcmp.le.f32.partialorder %v793, 0.7853982
        %vm795 = vcmp.lt.s32.totalorder %v791, 0
        %v796 = vand.u32 %v791, 2139095040
        %v797 = vshrl.u32 %v796, 23
        %v798 = vsub.s32 %v797, 127
        %v799 = vand.u32 2147483647, %v791
        %v800 = vand.u32 %v799, 8388607
        %v801 = vor.u32 %v800, 8388608
        %v802 = vsub.s32 0, %v801
        %v803 = vadd.s32 %v798, 1
        %vm804 = vcmp.gt.s32.totalorder %v803, 0
        %v805 = vsel %vm804, %v803, 0
        %v806 = vshrl.u32 %v805, 5
        %v807 = vand.u32 %v805, 31
        %v808 = vsub.s32 32, %v807
        %v809 = vshrl.u32 683565275, %v808
        %v810 = vshll.u32 683565275, %v807
        %v811 = vshrl.u32 2475754826, %v808
        %v812 = vor.u32 %v810, %v811
        %v813 = vshll.u32 2475754826, %v807
        %v814 = vshrl.u32 2131351028, %v808
        %v815 = vor.u32 %v813, %v814
        %v816 = vshll.u32 2131351028, %v807
        %v817 = vshrl.u32 2102212464, %v808
        %v818 = vor.u32 %v816, %v817
        %v819 = vshll.u32 2102212464, %v807
        %v820 = vshrl.u32 920167782, %v808
        %v821 = vor.u32 %v819, %v820
        %v822 = vshll.u32 920167782, %v807
        %v823 = vshrl.u32 1326507024, %v808
        %v824 = vor.u32 %v822, %v823
        %vm825 = vcmp.lt.s32.totalorder %v806, 1
        %vm826 = vcmp.lt.s32.totalorder %v806, 2
        %vm827 = vcmp.lt.s32.totalorder %v806, 3
        %vm828 = vcmp.lt.s32.totalorder %v806, 4
        %v829 = vsel %vm825, %v809, %v812
        %v830 = vsel %vm828, %v818, 2102212464
        %v831 = vsel %vm827, %v815, %v830
        %v832 = vsel %vm826, %v829, %v831
        %v833 = vsel %vm825, %v812, %v815
        %v834 = vsel %vm828, %v821, 920167782
        %v835 = vsel %vm827, %v818, %v834
        %v836 = vsel %vm826, %v833, %v835
        %v837 = vsel %vm825, %v815, %v818
        %v838 = vsel %vm828, %v824, 1326507024
        %v839 = vsel %vm827, %v821, %v838
        %v840 = vsel %vm826, %v837, %v839
        %v841 = vshll.u32 %v801, 8
        %v842 = vand.u32 %v841, 65535
        %v843 = vshrl.u32 %v841, 16
        %v844 = vand.u32 %v840, 65535
        %v845 = vshrl.u32 %v840, 16
        %v846 = vmul.u32 %v842, %v844
        %v847 = vmul.u32 %v842, %v845
        %v848 = vmul.u32 %v843, %v844
        %v849 = vmul.u32 %v843, %v845
        %v850 = vshll.u32 %v847, 16
        %v851 = vshrl.u32 %v847, 16
        %v852 = vshll.u32 %v848, 16
        %v853 = vshrl.u32 %v848, 16
        %vm854 = vc.u32 %v846, %v850
        %v855 = vsel %vm854, 1, 0
        %v856 = vadd.s32 %v846, %v850
        %v857 = vadd.s32 %v849, %v855
        %vm858 = vc.u32 %v856, %v852
        %v859 = vsel %vm858, 1, 0
        %v860 = vadd.s32 %v856, %v852
        %v861 = vadd.s32 %v857, %v859
        %v862 = vadd.s32 %v861, %v851
        %v863 = vadd.s32 %v862, %v853
        %v864 = vand.u32 %v841, 65535
        %v865 = vshrl.u32 %v841, 16
        %v866 = vand.u32 %v836, 65535
        %v867 = vshrl.u32 %v836, 16
        %v868 = vmul.u32 %v864, %v866
        %v869 = vmul.u32 %v864, %v867
        %v870 = vmul.u32 %v865, %v866
        %v871 = vmul.u32 %v865, %v867
        %v872 = vshll.u32 %v869, 16
        %v873 = vshrl.u32 %v869, 16
        %v874 = vshll.u32 %v870, 16
        %v875 = vshrl.u32 %v870, 16
        %vm876 = vc.u32 %v868, %v872
        %v877 = vsel %vm876, 1, 0
        %v878 = vadd.s32 %v868, %v872
        %v879 = vadd.s32 %v871, %v877
        %vm880 = vc.u32 %v878, %v874
        %v881 = vsel %vm880, 1, 0
        %v882 = vadd.s32 %v878, %v874
        %v883 = vadd.s32 %v879, %v881
        %v884 = vadd.s32 %v883, %v873
        %v885 = vadd.s32 %v884, %v875
        %v886 = vmul.u32 %v841, %v832
        %v887 = vadd.s32 %v863, %v882
        %vm888 = vc.u32 %v863, %v882
        %v889 = vadd.s32 %v885, 1
        %v890 = vsel %vm888, %v889, %v885
        %v891 = vadd.s32 %v886, %v890
        %v892 = vadd.s32 %v891, 536870912
        %v893 = vshrl.u32 %v892, 30
        %v894 = vshll.u32 %v893, 30
        %v895 = vsub.s32 %v891, %v894
        %vm896 = vcmp.lt.s32.totalorder %v895, 0
        %v897 = vsub.s32 0, %v895
        %v898 = vsel %vm896, %v897, %v895
        %v899 = vclz %v898
        %v900 = vsub.s32 %v899, 2
        %vm901 = vcmp.gt.s32.totalorder 0, %v900
        %v902 = vsel %vm901, 0, %v900
        %v903 = vsub.s32 32, %v902
        %v904 = vshll.u32 %v895, %v902
        %v905 = vshrl.u32 %v887, %v903
        %v906 = vor.u32 %v904, %v905
        %v907 = vsub.s32 4294967266, %v902
        %v908 = vadd.s32 %v907, 127
        %v909 = vshll.u32 %v908, 23
        %v910 = vor.u32 4788187, %v909
        %v911 = vand.u32 2147483647, %v910
        %v913 = vcvt.s32.f32 %v906
        %v914 = vmul.f32 %v913, %v911
        %v915 = vxor.u32 %v914, 2147483648
        %v916 = vsel %vm795, %v915, %v914
        %v917 = vsub.s32 4, %v893
        %v918 = vsel %vm795, %v917, %v893
        %v919 = vsel %vm794, %v791, %v916
        %v920 = vsel %vm794, 0, %v918
        %v921 = vmul.f32 %v919, %v919
        %v922 = vmul.f32 %v921, -0.001358992
        %v923 = vadd.f32 %v922, 0.041655596
        %v924 = vmul.f32 %v921, %v923
        %v925 = vadd.f32 %v924, -0.4999988
        %v926 = vmul.f32 %v921, %v925
        %v927 = vadd.f32 1.0, %v926
        %v928 = vmul.f32 %v919, %v919
        %v929 = vmul.f32 %v928, -0.00019511016
        %v930 = vadd.f32 %v929, 0.008332121
        %v931 = vmul.f32 %v928, %v930
        %v932 = vadd.f32 %v931, -0.16666654
        %v933 = vmul.f32 %v928, %v932
        %v934 = vadd.f32 %v933, 1.0
        %v935 = vmul.f32 %v934, %v919
        %vm936 = vweird.f32 %v791
        %v937 = vand.u32 %v920, 3
        %vm938 = vcmp.lt.s32.totalorder %v937, 2
        %vm939 = vcmp.eq.s32.totalorder %v937, 0
        %v940 = vxor.u32 %v935, 2147483648
        %v941 = vsel %vm939, %v927, %v940
        %vm942 = vcmp.eq.s32.totalorder %v937, 2
        %v943 = vxor.u32 %v927, 2147483648
        %v944 = vsel %vm942, %v943, %v935
        %v945 = vsel %vm938, %v941, %v944
        %v946 = vsel %vm936, nan, %v945
        %v947 = vand.u32 2147483647, %v792
        %vm948 = vcmp.le.f32.partialorder %v947, 0.7853982
        %vm949 = vcmp.lt.s32.totalorder %v792, 0
        %v950 = vand.u32 %v792, 2139095040
        %v951 = vshrl.u32 %v950, 23
        %v952 = vsub.s32 %v951, 127
        %v953 = vand.u32 2147483647, %v792
        %v954 = vand.u32 %v953, 8388607
        %v955 = vor.u32 %v954, 8388608
        %v956 = vsub.s32 0, %v955
        %v957 = vadd.s32 %v952, 1
        %vm958 = vcmp.gt.s32.totalorder %v957, 0
        %v959 = vsel %vm958, %v957, 0
        %v960 = vshrl.u32 %v959, 5
        %v961 = vand.u32 %v959, 31
        %v962 = vsub.s32 32, %v961
        %v963 = vshrl.u32 683565275, %v962
        %v964 = vshll.u32 683565275, %v961
        %v965 = vshrl.u32 2475754826, %v962
        %v966 = vor.u32 %v964, %v965
        %v967 = vshll.u32 2475754826, %v961
        %v968 = vshrl.u32 2131351028, %v962
        %v969 = vor.u32 %v967, %v968
        %v970 = vshll.u32 2131351028, %v961
        %v971 = vshrl.u32 2102212464, %v962
        %v972 = vor.u32 %v970, %v971
        %v973 = vshll.u32 2102212464, %v961
        %v974 = vshrl.u32 920167782, %v962
        %v975 = vor.u32 %v973, %v974
        %v976 = vshll.u32 920167782, %v961
        %v977 = vshrl.u32 1326507024, %v962
        %v978 = vor.u32 %v976, %v977
        %vm979 = vcmp.lt.s32.totalorder %v960, 1
        %vm980 = vcmp.lt.s32.totalorder %v960, 2
        %vm981 = vcmp.lt.s32.totalorder %v960, 3
        %vm982 = vcmp.lt.s32.totalorder %v960, 4
        %v983 = vsel %vm979, %v963, %v966
        %v984 = vsel %vm982, %v972, 2102212464
        %v985 = vsel %vm981, %v969, %v984
        %v986 = vsel %vm980, %v983, %v985
        %v987 = vsel %vm979, %v966, %v969
        %v988 = vsel %vm982, %v975, 920167782
        %v989 = vsel %vm981, %v972, %v988
        %v990 = vsel %vm980, %v987, %v989
        %v991 = vsel %vm979, %v969, %v972
        %v992 = vsel %vm982, %v978, 1326507024
        %v993 = vsel %vm981, %v975, %v992
        %v994 = vsel %vm980, %v991, %v993
        %v995 = vshll.u32 %v955, 8
        %v996 = vand.u32 %v995, 65535
        %v997 = vshrl.u32 %v995, 16
        %v998 = vand.u32 %v994, 65535
        %v999 = vshrl.u32 %v994, 16
        %v1000 = vmul.u32 %v996, %v998
        %v1001 = vmul.u32 %v996, %v999
        %v1002 = vmul.u32 %v997, %v998
        %v1003 = vmul.u32 %v997, %v999
        %v1004 = vshll.u32 %v1001, 16
        %v1005 = vshrl.u32 %v1001, 16
        %v1006 = vshll.u32 %v1002, 16
        %v1007 = vshrl.u32 %v1002, 16
        %vm1008 = vc.u32 %v1000, %v1004
        %v1009 = vsel %vm1008, 1, 0
        %v1010 = vadd.s32 %v1000, %v1004
        %v1011 = vadd.s32 %v1003, %v1009
        %vm1012 = vc.u32 %v1010, %v1006
        %v1013 = vsel %vm1012, 1, 0
        %v1014 = vadd.s32 %v1010, %v1006
        %v1015 = vadd.s32 %v1011, %v1013
        %v1016 = vadd.s32 %v1015, %v1005
        %v1017 = vadd.s32 %v1016, %v1007
        %v1018 = vand.u32 %v995, 65535
        %v1019 = vshrl.u32 %v995, 16
        %v1020 = vand.u32 %v990, 65535
        %v1021 = vshrl.u32 %v990, 16
        %v1022 = vmul.u32 %v1018, %v1020
        %v1023 = vmul.u32 %v1018, %v1021
        %v1024 = vmul.u32 %v1019, %v1020
        %v1025 = vmul.u32 %v1019, %v1021
        %v1026 = vshll.u32 %v1023, 16
        %v1027 = vshrl.u32 %v1023, 16
        %v1028 = vshll.u32 %v1024, 16
        %v1029 = vshrl.u32 %v1024, 16
        %vm1030 = vc.u32 %v1022, %v1026
        %v1031 = vsel %vm1030, 1, 0
        %v1032 = vadd.s32 %v1022, %v1026
        %v1033 = vadd.s32 %v1025, %v1031
        %vm1034 = vc.u32 %v1032, %v1028
        %v1035 = vsel %vm1034, 1, 0
        %v1036 = vadd.s32 %v1032, %v1028
        %v1037 = vadd.s32 %v1033, %v1035
        %v1038 = vadd.s32 %v1037, %v1027
        %v1039 = vadd.s32 %v1038, %v1029
        %v1040 = vmul.u32 %v995, %v986
        %v1041 = vadd.s32 %v1017, %v1036
        %vm1042 = vc.u32 %v1017, %v1036
        %v1043 = vadd.s32 %v1039, 1
        %v1044 = vsel %vm1042, %v1043, %v1039
        %v1045 = vadd.s32 %v1040, %v1044
        %v1046 = vadd.s32 %v1045, 536870912
        %v1047 = vshrl.u32 %v1046, 30
        %v1048 = vshll.u32 %v1047, 30
        %v1049 = vsub.s32 %v1045, %v1048
        %vm1050 = vcmp.lt.s32.totalorder %v1049, 0
        %v1051 = vsub.s32 0, %v1049
        %v1052 = vsel %vm1050, %v1051, %v1049
        %v1053 = vclz %v1052
        %v1054 = vsub.s32 %v1053, 2
        %vm1055 = vcmp.gt.s32.totalorder 0, %v1054
        %v1056 = vsel %vm1055, 0, %v1054
        %v1057 = vsub.s32 32, %v1056
        %v1058 = vshll.u32 %v1049, %v1056
        %v1059 = vshrl.u32 %v1041, %v1057
        %v1060 = vor.u32 %v1058, %v1059
        %v1061 = vsub.s32 4294967266, %v1056
        %v1062 = vadd.s32 %v1061, 127
        %v1063 = vshll.u32 %v1062, 23
        %v1064 = vor.u32 4788187, %v1063
        %v1065 = vand.u32 2147483647, %v1064
        %v1067 = vcvt.s32.f32 %v1060
        %v1068 = vmul.f32 %v1067, %v1065
        %v1069 = vxor.u32 %v1068, 2147483648
        %v1070 = vsel %vm949, %v1069, %v1068
        %v1071 = vsub.s32 4, %v1047
        %v1072 = vsel %vm949, %v1071, %v1047
        %v1073 = vsel %vm948, %v792, %v1070
        %v1074 = vsel %vm948, 0, %v1072
        %v1075 = vmul.f32 %v1073, %v1073
        %v1076 = vmul.f32 %v1075, -0.001358992
        %v1077 = vadd.f32 %v1076, 0.041655596
        %v1078 = vmul.f32 %v1075, %v1077
        %v1079 = vadd.f32 %v1078, -0.4999988
        %v1080 = vmul.f32 %v1075, %v1079
        %v1081 = vadd.f32 1.0, %v1080
        %v1082 = vmul.f32 %v1073, %v1073
        %v1083 = vmul.f32 %v1082, -0.00019511016
        %v1084 = vadd.f32 %v1083, 0.008332121
        %v1085 = vmul.f32 %v1082, %v1084
        %v1086 = vadd.f32 %v1085, -0.16666654
        %v1087 = vmul.f32 %v1082, %v1086
        %v1088 = vadd.f32 %v1087, 1.0
        %v1089 = vmul.f32 %v1088, %v1073
        %vm1090 = vweird.f32 %v792
        %v1091 = vand.u32 %v1074, 3
        %vm1092 = vcmp.lt.s32.totalorder %v1091, 2
        %vm1093 = vcmp.eq.s32.totalorder %v1091, 0
        %v1094 = vxor.u32 %v1089, 2147483648
        %v1095 = vsel %vm1093, %v1081, %v1094
        %vm1096 = vcmp.eq.s32.totalorder %v1091, 2
        %v1097 = vxor.u32 %v1081, 2147483648
        %v1098 = vsel %vm1096, %v1097, %v1089
        %v1099 = vsel %vm1092, %v1095, %v1098
        %v1100 = vsel %vm1090, nan, %v1099
        %s1101 = scalar_lea.vmem %s153, 32 [#allocation5]
        %1102 = vst.msk [vmem:[%s1101] sm:$0xff] %vm469, %v946
        %1103 = vst.msk [vmem:[%s1101 + $0x8] sm:$0xff] %vm469, %v1100
        %s1104 = sand.u32 %s68, 1
        %s1105 = scalar_lea.sflag [#allocation4], %s1104
        %s1106 = sand.u32 %s68, 1
        %s1107 = smul.addr %s1106, 48
        %s1108 = scalar_lea.vmem [#allocation5], %s1107
        // Predicated region
        $region29: #{tpu_custom_call.1} parent=23 // pred_check
          %p1109 = pneg %p78
        $region30: #{tpu_custom_call.1} parent=23 // pred_check_branch
          %1111 = sbr.rel (%p1109) target = $region32
        $region31: #{tpu_custom_call.1} parent=23 // pred_region
          %1113 = vsyncadd %s1105, 0
          %s1114 = smul.addr %s22, 6
          %s1115 = sadd.s32 %s23, %s1114
          %s1116 = smul.addr %s1115, 8
          %s1117 = scalar_lea.hbm %s1, %s1116
          %s1118 = sshll.u32 %s1108, 4
          %s1119 = int_to_ptr.vmem [resolvable:$true] %s1118
          %s1120 = sshll.u32 %s1117, 4
          %s1121 = int_to_ptr.hbm [resolvable:$true] %s1120
          %1126 = dma.vmem_to_hbm [thread:$0]  %s1119, 768, %s1121, %s1105, 128, 128, 8
        $region32: #{tpu_custom_call.1} parent=23 // pred_fallthru
          _
      $region24: #{tpu_custom_call.1} parent=5 // pred_fallthru
        _
      %p1127 = scmp.le.s32.totalorder 2, %s13
      // Predicated region
      $region33: #{tpu_custom_call.1} parent=5 // pred_check
        %p1128 = pneg %p1127
      $region34: #{tpu_custom_call.1} parent=5 // pred_check_branch
        %1130 = sbr.rel (%p1128) target = $region36
      $region35: #{tpu_custom_call.1} parent=5 // pred_region
        %s1131 = ssub.s32 %s13, 2
        // Predicated region
        $region37: #{tpu_custom_call.1} parent=35 // pred_check
          %p1132 = pneg %p84
        $region38: #{tpu_custom_call.1} parent=35 // pred_check_branch
          %1134 = sbr.rel (%p1132) target = $region40
        $region39: #{tpu_custom_call.1} parent=35 // pred_region
          %s1135 = sand.u32 %s69, 1
          %s1136 = scalar_lea.sflag [#allocation4], %s1135
          %s1137 = sand.u32 %s69, 1
          %s1138 = smul.addr %s1137, 48
          %s1139 = scalar_lea.vmem [#allocation5], %s1138
          %1141 = dma.done %s1136, 768
        $region40: #{tpu_custom_call.1} parent=35 // pred_fallthru
          _
      $region36: #{tpu_custom_call.1} parent=5 // pred_fallthru
        _
    $region6: #{tpu_custom_call.1} parent=1 // loop_footer
      %s17 = sadd.s32 1, %s13
    $region7: #{tpu_custom_call.1} parent=1 // loop_footer_branch
      %12 = sbr.rel target = $region3
    $region8: #{tpu_custom_call.1} parent=1 // loop_exit
      _
    %1142 = vsyncpa [#allocation3], 1
    %s1143 = scalar_lea.sflag [#allocation3], 1
    %1144 = vsyncpa %s1143, 1
    %1145 = vsyncpa [#allocation4], 1
    %s1146 = scalar_lea.sflag [#allocation4], 1
    %1147 = vsyncpa %s1146, 1

</llo_original>
